<compile_context>
chip_gen: v7x
topology: tpu7x:2x2x1
jax: 0.10.0
libtpu: 0.0.40
codegen_flags: <defaults>
</compile_context>

<pallas_src>
import functools

import jax
import jax.numpy as jnp
from jax.experimental import pallas as pl
from jax.experimental.pallas import tpu as pltpu


def _modulating_pow(base, beta):
    """base**beta; small integer beta -> repeated VPU multiplies (no EUP exp/log)."""
    if float(beta).is_integer() and 0 < beta <= 8:
        b = int(beta)
        out = base
        for _ in range(b - 1):
            out = out * base
        return out
    return jnp.power(base, beta)


def _qfl_kernel(pred_ref, label_ref, score_ref, out_ref, *, beta, n_valid, mask_rows):
    x = pred_ref[...].astype(jnp.float32)          # (TN, C), cast from native dtype
    label = label_ref[...]                          # (TN, 1) int32
    score = score_ref[...].astype(jnp.float32)      # (TN, 1)
    tn, c = x.shape

    # One exp per element, reused for both the BCE(target=0) term and sigmoid.
    e = jnp.exp(-jnp.abs(x))                                  # EUP exp
    softplus = jnp.maximum(x, 0.0) + jnp.log1p(e)             # = BCE_with_logits(x, 0)
    inv = pl.reciprocal(1.0 + e)                              # EUP reciprocal
    sig = jnp.where(x >= 0.0, inv, e * inv)                   # sigmoid(x)

    neg_loss = softplus * _modulating_pow(sig, beta)                      # target = 0
    pos_bce = softplus - score * x                                        # BCE_with_logits(x, score)
    pos_loss = pos_bce * _modulating_pow(jnp.abs(score - sig), beta)

    col = jax.lax.broadcasted_iota(jnp.int32, (tn, c), 1)
    is_pos = (label >= 0) & (label < c) & (col == label)
    loss = jnp.where(is_pos, pos_loss, neg_loss)                          # (TN, C)

    if mask_rows:  # zero out rows that only exist because of padding
        row = jax.lax.broadcasted_iota(jnp.int32, (tn, 1), 0) + pl.program_id(0) * tn
        loss = jnp.where(row < n_valid, loss, 0.0)

    # Lane-dense output: per-row sums laid out along the lane axis.
    out_ref[...] = jnp.sum(loss, axis=1).reshape(1, 1, tn)


def _choose_row_tile(n, c, itemsize):
    """Largest row tile (multiple of 8, <=1024) whose double-buffered pred block
    stays within a ~6 MiB VMEM budget (safe on v5e/v6e 128 MiB and v7x 64 MiB)."""
    budget = 6 * 1024 * 1024
    per_row = 2 * c * max(int(itemsize), 1)        # double-buffered pred bytes per row
    rt = max(8, budget // per_row)
    rt = min(rt, 1024)
    n_pad8 = -(-n // 8) * 8
    rt = min(rt, n_pad8)
    rt = max(8, (rt // 8) * 8)
    return int(rt)


def quality_focal_loss_pallas(pred, label, score, *, beta=2.0,
                              weight=None, avg_factor=None,
                              reduction="mean", loss_weight=1.0,
                              row_tile=None):
    """QFL forward. pred: (N, C) float (any float dtype); label: (N,) int; score: (N,) float."""
    n, c = pred.shape
    if row_tile is None:
        row_tile = _choose_row_tile(n, c, jnp.dtype(pred.dtype).itemsize)
    row_tile = max(8, (int(row_tile) // 8) * 8)

    n_pad = -(-n // row_tile) * row_tile
    num_blocks = n_pad // row_tile

    label2d = label.astype(jnp.int32).reshape(n, 1)
    score2d = score.astype(jnp.float32).reshape(n, 1)
    pred_in = pred                                   # native dtype -> fewer HBM bytes
    if n_pad != n:
        pad = n_pad - n
        pred_in = jnp.pad(pred_in, ((0, pad), (0, 0)))
        label2d = jnp.pad(label2d, ((0, pad), (0, 0)), constant_values=-1)
        score2d = jnp.pad(score2d, ((0, pad), (0, 0)))

    kernel = functools.partial(_qfl_kernel, beta=float(beta), n_valid=n,
                               mask_rows=(n_pad != n))

    out = pl.pallas_call(
        kernel,
        out_shape=jax.ShapeDtypeStruct((num_blocks, 1, row_tile), jnp.float32),
        grid_spec=pltpu.PrefetchScalarGridSpec(
            num_scalar_prefetch=0,
            grid=(num_blocks,),
            in_specs=[
                pl.BlockSpec((row_tile, c), lambda i: (i, 0)),
                pl.BlockSpec((row_tile, 1), lambda i: (i, 0)),
                pl.BlockSpec((row_tile, 1), lambda i: (i, 0)),
            ],
            out_specs=pl.BlockSpec((1, 1, row_tile), lambda i: (i, 0, 0)),
        ),
        compiler_params=pltpu.CompilerParams(
            dimension_semantics=("parallel",),          # megacore sharding on v7x
            vmem_limit_bytes=32 * 1024 * 1024,
        ),
    )(pred_in, label2d, score2d)

    per_row = out.reshape(n_pad)[:n]                  # (N,) — matches quality_focal_loss output

    # weighted_loss-style glue (weight / reduction / avg_factor) in cheap JAX.
    if weight is not None:
        per_row = per_row * weight.astype(per_row.dtype)
    if avg_factor is None:
        if reduction == "none":
            red = per_row
        elif reduction == "sum":
            red = jnp.sum(per_row)
        elif reduction == "mean":
            red = jnp.mean(per_row)
        else:
            raise ValueError(reduction)
    else:
        if reduction == "mean":
            red = jnp.sum(per_row) / avg_factor
        elif reduction == "none":
            red = per_row
        else:
            raise ValueError("avg_factor can not be used with reduction='sum'")
    return loss_weight * red


def _qfl_reference(pred, label, score, *, beta=2.0):
    """Pure-JAX reference mirroring the PyTorch semantics (use_sigmoid=True)."""
    pred = pred.astype(jnp.float32)
    score = score.astype(jnp.float32)
    n, c = pred.shape
    sig = jax.nn.sigmoid(pred)
    softplus = jnp.maximum(pred, 0.0) + jnp.log1p(jnp.exp(-jnp.abs(pred)))
    loss = softplus * sig ** beta
    col = jnp.arange(c)[None, :]
    lab = label.astype(jnp.int32)[:, None]
    sc = score[:, None]
    pos_loss = (softplus - sc * pred) * jnp.abs(sc - sig) ** beta
    mask = (lab >= 0) & (lab < c) & (col == lab)
    loss = jnp.where(mask, pos_loss, loss)
    return loss.sum(axis=1)


if __name__ == "__main__":
    key = jax.random.PRNGKey(0)
    k1, k2, k3, k4, k5, k6 = jax.random.split(key, 6)

    # Case 1: small, tile-aligned, f32, mean reduction.
    N1, C1 = 32, 8
    pred1 = jax.random.normal(k1, (N1, C1), dtype=jnp.float32) * 2.0
    label1 = jax.random.randint(k2, (N1,), 0, C1 + 2, dtype=jnp.int32)  # >= C acts as background
    score1 = jax.random.uniform(k3, (N1,), dtype=jnp.float32)

    loss1 = quality_focal_loss_pallas(pred1, label1, score1,
                                      beta=2.0, reduction="mean", loss_weight=1.0)
    loss1 = jax.block_until_ready(loss1)
    ref1 = jnp.mean(_qfl_reference(pred1, label1, score1, beta=2.0))
    assert jnp.allclose(loss1, ref1, rtol=2e-5, atol=2e-5), (loss1, ref1)

    # Case 2: N not a tile multiple (exercises padded-row masking), bf16 pred, sum reduction.
    N2, C2 = 37, 16
    pred2 = (jax.random.normal(k4, (N2, C2), dtype=jnp.float32) * 2.0).astype(jnp.bfloat16)
    label2 = jax.random.randint(k5, (N2,), 0, C2 + 4, dtype=jnp.int32)
    score2 = jax.random.uniform(k6, (N2,), dtype=jnp.float32)

    loss2 = quality_focal_loss_pallas(pred2, label2, score2,
                                      beta=2.0, reduction="sum", loss_weight=0.5)
    loss2 = jax.block_until_ready(loss2)
    ref2 = 0.5 * jnp.sum(_qfl_reference(pred2.astype(jnp.float32), label2, score2, beta=2.0))
    assert jnp.allclose(loss2, ref2, rtol=2e-5, atol=2e-5), (loss2, ref2)

    print("KERNEL_OK")
</pallas_src>

<mosaic_0001>
module attributes {stable_mosaic.version = 11 : i64} {
  func.func @_qfl_kernel(%arg0: i32, %arg1: memref<32x8xf32, #tpu.memory_space<vmem>>, %arg2: memref<32x1xi32, #tpu.memory_space<vmem>>, %arg3: memref<32x1xf32, #tpu.memory_space<vmem>>, %arg4: memref<1x1x32xf32, #tpu.memory_space<vmem>>) attributes {dimension_semantics = [#tpu.dimension_semantics<parallel>], iteration_bounds = array<i64: 1>, scalar_prefetch = 0 : i64, scratch_operands = 0 : i64, tpu.core_type = #tpu.core_type<tc>, window_params = [{transform_indices = @transform_0, window_bounds = array<i64: 32, 8>}, {transform_indices = @transform_1, window_bounds = array<i64: 32, 1>}, {transform_indices = @transform_2, window_bounds = array<i64: 32, 1>}, {transform_indices = @transform_3, window_bounds = array<i64: 1, 1, 32>}]} {
    %c0 = arith.constant 0 : index
    %c0_0 = arith.constant 0 : index
    %0 = vector.load %arg1[%c0, %c0_0] : memref<32x8xf32, #tpu.memory_space<vmem>>, vector<32x8xf32>
    %c0_1 = arith.constant 0 : index
    %c0_2 = arith.constant 0 : index
    %1 = vector.load %arg2[%c0_1, %c0_2] : memref<32x1xi32, #tpu.memory_space<vmem>>, vector<32x1xi32>
    %c0_3 = arith.constant 0 : index
    %c0_4 = arith.constant 0 : index
    %2 = vector.load %arg3[%c0_3, %c0_4] : memref<32x1xf32, #tpu.memory_space<vmem>>, vector<32x1xf32>
    %3 = math.absf %0 : vector<32x8xf32>
    %cst = arith.constant 0.000000e+00 : f32
    %4 = vector.broadcast %cst : f32 to vector<32x8xf32>
    %5 = arith.subf %4, %3 : vector<32x8xf32>
    %6 = math.exp %5 : vector<32x8xf32>
    %cst_5 = arith.constant 0.000000e+00 : f32
    %7 = vector.broadcast %cst_5 : f32 to vector<32x8xf32>
    %8 = arith.maximumf %0, %7 : vector<32x8xf32>
    %9 = math.log1p %6 : vector<32x8xf32>
    %10 = arith.addf %8, %9 : vector<32x8xf32>
    %cst_6 = arith.constant 1.000000e+00 : f32
    %11 = vector.broadcast %cst_6 : f32 to vector<32x8xf32>
    %12 = arith.addf %11, %6 : vector<32x8xf32>
    %13 = tpu.reciprocal %12 : vector<32x8xf32> -> vector<32x8xf32>
    %cst_7 = arith.constant 0.000000e+00 : f32
    %14 = vector.broadcast %cst_7 : f32 to vector<32x8xf32>
    %15 = arith.cmpf oge, %0, %14 : vector<32x8xf32>
    %16 = arith.mulf %6, %13 : vector<32x8xf32>
    %17 = arith.select %15, %13, %16 : vector<32x8xi1>, vector<32x8xf32>
    %18 = arith.mulf %17, %17 : vector<32x8xf32>
    %19 = arith.mulf %10, %18 : vector<32x8xf32>
    %20 = vector.broadcast %2 : vector<32x1xf32> to vector<32x8xf32>
    %21 = arith.mulf %20, %0 : vector<32x8xf32>
    %22 = arith.subf %10, %21 : vector<32x8xf32>
    %23 = vector.broadcast %2 : vector<32x1xf32> to vector<32x8xf32>
    %24 = arith.subf %23, %17 : vector<32x8xf32>
    %25 = math.absf %24 : vector<32x8xf32>
    %26 = arith.mulf %25, %25 : vector<32x8xf32>
    %27 = arith.mulf %22, %26 : vector<32x8xf32>
    %28 = tpu.iota {dimensions = array<i32: 1>} : vector<32x8xi32>
    %c0_i32 = arith.constant 0 : i32
    %29 = vector.broadcast %c0_i32 : i32 to vector<32x1xi32>
    %30 = arith.cmpi sge, %1, %29 : vector<32x1xi32>
    %c8_i32 = arith.constant 8 : i32
    %31 = vector.broadcast %c8_i32 : i32 to vector<32x1xi32>
    %32 = arith.cmpi slt, %1, %31 : vector<32x1xi32>
    %33 = arith.andi %30, %32 : vector<32x1xi1>
    %34 = vector.broadcast %1 : vector<32x1xi32> to vector<32x8xi32>
    %35 = arith.cmpi eq, %28, %34 : vector<32x8xi32>
    %36 = vector.broadcast %33 : vector<32x1xi1> to vector<32x8xi1>
    %37 = arith.andi %36, %35 : vector<32x8xi1>
    %38 = arith.select %37, %27, %19 : vector<32x8xi1>, vector<32x8xf32>
    %cst_8 = arith.constant dense<0.000000e+00> : vector<32xf32>
    %39 = vector.multi_reduction <add>, %38, %cst_8 [1] : vector<32x8xf32> to vector<32xf32>
    %40 = vector.shape_cast %39 : vector<32xf32> to vector<1x1x32xf32>
    %c0_9 = arith.constant 0 : index
    %c0_10 = arith.constant 0 : index
    %c0_11 = arith.constant 0 : index
    %41 = vector.load %arg4[%c0_9, %c0_10, %c0_11] : memref<1x1x32xf32, #tpu.memory_space<vmem>>, vector<1x1x32xf32>
    tpu.vector_store %arg4[%c0_9, %c0_10, %c0_11], %40 {strides = array<i32>} : memref<1x1x32xf32, #tpu.memory_space<vmem>>, vector<1x1x32xf32>,
    return
  }
  func.func @transform_0(%arg0: i32) -> (i32, i32) {
    %c0_i32 = arith.constant 0 : i32
    %c0_i32_0 = arith.constant 0 : i32
    return %arg0, %c0_i32 : i32, i32
  }
  func.func @transform_1(%arg0: i32) -> (i32, i32) {
    %c0_i32 = arith.constant 0 : i32
    %c0_i32_0 = arith.constant 0 : i32
    return %arg0, %c0_i32 : i32, i32
  }
  func.func @transform_2(%arg0: i32) -> (i32, i32) {
    %c0_i32 = arith.constant 0 : i32
    %c0_i32_0 = arith.constant 0 : i32
    return %arg0, %c0_i32 : i32, i32
  }
  func.func @transform_3(%arg0: i32) -> (i32, i32, i32) {
    %c0_i32 = arith.constant 0 : i32
    %c0_i32_0 = arith.constant 0 : i32
    %c0_i32_1 = arith.constant 0 : i32
    return %arg0, %c0_i32, %c0_i32_0 : i32, i32, i32
  }
}

</mosaic_0001>

<llo_original>
// kernel: tpu_custom_call.1
$region0: #{tpu_custom_call.1}
  #allocation0 [shape = 'u32[]', space=smem, size = 0x4, offset = 0x4, fixed_abs, tag = 'smem constant byte address 0x4 - core index']
  #allocation1 [shape = 'u32[144,128]{1,0:T(1,128)}', space=vmem, size = 0x12000, scoped, tag = 'internal scratch']
  %s0 = inlined_call_operand.vmem [shape: f32[32,8], index: 0, kind: input, shape index: {}]
  %s1 = inlined_call_operand.vmem [shape: s32[32,1], index: 1, kind: input, shape index: {}]
  %s2 = inlined_call_operand.vmem [shape: f32[32,1], index: 2, kind: input, shape index: {}]
  %s3 = inlined_call_operand.hbm [shape: f32[1,1,32], index: 3, kind: output, shape index: {}]
  %s4 = sld [smem:[#allocation0]]
  $region22: #{tpu_custom_call.1} parent=0
    _
  %s6 = ssub.s32 1, %s4
  %s7 = scalar_select 0, %s6, %s4
  $region1: #{tpu_custom_call.1} parent=0
    #allocation2 [shape = 'u8[512]{0}', space=vmem, size = 0x400, scoped, tag = 'output window, operand 0, single buffered']
    #allocation3 [shape = 's32[1]{0}', space=sflag, size = 0x4, scoped, tag = 'scoped memory for tpu_custom_call.1']
    %8 = vsyncpa [#allocation3], 0
    // Predicated region
    $region2: #{tpu_custom_call.1} parent=1 // pred_check
      _
    $region3: #{tpu_custom_call.1} parent=1 // pred_check_branch
      %10 = sbr.rel (0) target = $region5
    $region4: #{tpu_custom_call.1} parent=1 // pred_region
      _
    $region5: #{tpu_custom_call.1} parent=1 // pred_fallthru
      _
    // Predicated region
    $region6: #{tpu_custom_call.1} parent=1 // pred_check
      _
    $region7: #{tpu_custom_call.1} parent=1 // pred_check_branch
      %12 = sbr.rel (0) target = $region9
    $region8: #{tpu_custom_call.1} parent=1 // pred_region
      _
    $region9: #{tpu_custom_call.1} parent=1 // pred_fallthru
      _
    // Predicated region
    $region10: #{tpu_custom_call.1} parent=1 // pred_check
      _
    $region11: #{tpu_custom_call.1} parent=1 // pred_check_branch
      %14 = sbr.rel (0) target = $region13
    $region12: #{tpu_custom_call.1} parent=1 // pred_region
      _
    $region13: #{tpu_custom_call.1} parent=1 // pred_fallthru
      _
    %v15 = vld [vmem:[%s0] sm:$0xff]
    %v16 = vld [vmem:[%s0 + $0x8] sm:$0xff]
    %v17 = vld [vmem:[%s0 + $0x10] sm:$0xff]
    %v18 = vld [vmem:[%s0 + $0x18] sm:$0xff]
    %v19 = vld [vmem:[%s1] sm:$0xff]
    %v20 = vld [vmem:[%s1 + $0x8] sm:$0xff]
    %v21 = vld [vmem:[%s1 + $0x10] sm:$0xff]
    %v22 = vld [vmem:[%s1 + $0x18] sm:$0xff]
    %v23 = vld [vmem:[%s2] sm:$0xff]
    %v24 = vld [vmem:[%s2 + $0x8] sm:$0xff]
    %v25 = vld [vmem:[%s2 + $0x10] sm:$0xff]
    %v26 = vld [vmem:[%s2 + $0x18] sm:$0xff]
    %v27 = vand.u32 2147483647, %v15
    %v28 = vand.u32 2147483647, %v16
    %v29 = vand.u32 2147483647, %v17
    %v30 = vand.u32 2147483647, %v18
    %v31 = vsub.f32 0.0, %v27
    %v32 = vsub.f32 0.0, %v28
    %v33 = vsub.f32 0.0, %v29
    %v34 = vsub.f32 0.0, %v30
    %v35 = vmul.f32 %v31, 1.442695
    %v36 = vpow.pop %v35
    %v37 = vmul.f32 %v32, 1.442695
    %v38 = vpow.pop %v37
    %v39 = vmul.f32 %v33, 1.442695
    %v40 = vpow.pop %v39
    %v41 = vmul.f32 %v34, 1.442695
    %v42 = vpow.pop %v41
    %v43 = vmax.f32 %v15, 0.0
    %v44 = vmax.f32 %v16, 0.0
    %v45 = vmax.f32 %v17, 0.0
    %v46 = vmax.f32 %v18, 0.0
    %v47 = vadd.f32 %v36, 1.0
    %v48 = vlog2.pop %v47
    %v49 = vmul.f32 %v48, 0.6931472
    %v50 = vmul.f32 -0.5, %v36
    %v51 = vadd.f32 %v50, 1.0
    %v52 = vmul.f32 %v51, %v36
    %v53 = vand.u32 2147483647, %v36
    %vm54 = vcmp.lt.f32.partialorder %v53, 0.0004427343
    %v55 = vsel %vm54, %v52, %v49
    %v56 = vadd.f32 %v38, 1.0
    %v57 = vlog2.pop %v56
    %v58 = vmul.f32 %v57, 0.6931472
    %v59 = vmul.f32 -0.5, %v38
    %v60 = vadd.f32 %v59, 1.0
    %v61 = vmul.f32 %v60, %v38
    %v62 = vand.u32 2147483647, %v38
    %vm63 = vcmp.lt.f32.partialorder %v62, 0.0004427343
    %v64 = vsel %vm63, %v61, %v58
    %v65 = vadd.f32 %v40, 1.0
    %v66 = vlog2.pop %v65
    %v67 = vmul.f32 %v66, 0.6931472
    %v68 = vmul.f32 -0.5, %v40
    %v69 = vadd.f32 %v68, 1.0
    %v70 = vmul.f32 %v69, %v40
    %v71 = vand.u32 2147483647, %v40
    %vm72 = vcmp.lt.f32.partialorder %v71, 0.0004427343
    %v73 = vsel %vm72, %v70, %v67
    %v74 = vadd.f32 %v42, 1.0
    %v75 = vlog2.pop %v74
    %v76 = vmul.f32 %v75, 0.6931472
    %v77 = vmul.f32 -0.5, %v42
    %v78 = vadd.f32 %v77, 1.0
    %v79 = vmul.f32 %v78, %v42
    %v80 = vand.u32 2147483647, %v42
    %vm81 = vcmp.lt.f32.partialorder %v80, 0.0004427343
    %v82 = vsel %vm81, %v79, %v76
    %v83 = vadd.f32 %v43, %v55
    %v84 = vadd.f32 %v44, %v64
    %v85 = vadd.f32 %v45, %v73
    %v86 = vadd.f32 %v46, %v82
    %v87 = vadd.f32 %v36, 1.0
    %v88 = vadd.f32 %v38, 1.0
    %v89 = vadd.f32 %v40, 1.0
    %v90 = vadd.f32 %v42, 1.0
    %v91 = vrcp.pop %v87
    %v92 = vrcp.pop %v88
    %v93 = vrcp.pop %v89
    %v94 = vrcp.pop %v90
    %vm95 = vcmp.ge.f32.partialorder %v15, 0.0
    %vm96 = vcmp.ge.f32.partialorder %v16, 0.0
    %vm97 = vcmp.ge.f32.partialorder %v17, 0.0
    %vm98 = vcmp.ge.f32.partialorder %v18, 0.0
    %v99 = vmul.f32 %v36, %v91
    %v100 = vmul.f32 %v38, %v92
    %v101 = vmul.f32 %v40, %v93
    %v102 = vmul.f32 %v42, %v94
    %v103 = vsel %vm95, %v91, %v99
    %v104 = vsel %vm96, %v92, %v100
    %v105 = vsel %vm97, %v93, %v101
    %v106 = vsel %vm98, %v94, %v102
    %v107 = vmul.f32 %v103, %v103
    %v108 = vmul.f32 %v104, %v104
    %v109 = vmul.f32 %v105, %v105
    %v110 = vmul.f32 %v106, %v106
    %v111 = vmul.f32 %v83, %v107
    %v112 = vmul.f32 %v84, %v108
    %v113 = vmul.f32 %v85, %v109
    %v114 = vmul.f32 %v86, %v110
    %116 = vset.pattern.permute.xlu0 0
    %117 = vperm.xlu0 %116, %v23
    %v118 = vpop.permute.xlu0 %117
    %121 = vset.pattern.permute.xlu0 0
    %122 = vperm.xlu0 %121, %v24
    %v123 = vpop.permute.xlu0 %122
    %126 = vset.pattern.permute.xlu0 0
    %127 = vperm.xlu0 %126, %v25
    %v128 = vpop.permute.xlu0 %127
    %131 = vset.pattern.permute.xlu0 0
    %132 = vperm.xlu0 %131, %v26
    %v133 = vpop.permute.xlu0 %132
    %v135 = vmul.f32 %v118, %v15
    %v136 = vmul.f32 %v123, %v16
    %v137 = vmul.f32 %v128, %v17
    %v138 = vmul.f32 %v133, %v18
    %v139 = vsub.f32 %v83, %v135
    %v140 = vsub.f32 %v84, %v136
    %v141 = vsub.f32 %v85, %v137
    %v142 = vsub.f32 %v86, %v138
    %v143 = vsub.f32 %v118, %v103
    %v144 = vsub.f32 %v123, %v104
    %v145 = vsub.f32 %v128, %v105
    %v146 = vsub.f32 %v133, %v106
    %v147 = vand.u32 2147483647, %v143
    %v148 = vand.u32 2147483647, %v144
    %v149 = vand.u32 2147483647, %v145
    %v150 = vand.u32 2147483647, %v146
    %v151 = vmul.f32 %v147, %v147
    %v152 = vmul.f32 %v148, %v148
    %v153 = vmul.f32 %v149, %v149
    %v154 = vmul.f32 %v150, %v150
    %v155 = vmul.f32 %v139, %v151
    %v156 = vmul.f32 %v140, %v152
    %v157 = vmul.f32 %v141, %v153
    %v158 = vmul.f32 %v142, %v154
    %v159 = vlaneseq
    %v160 = vand.u32 %v159, 127
    %vm161 = vcmp.ge.s32.totalorder %v19, 0
    %vm162 = vcmp.ge.s32.totalorder %v20, 0
    %vm163 = vcmp.ge.s32.totalorder %v21, 0
    %vm164 = vcmp.ge.s32.totalorder %v22, 0
    %vm165 = vcmp.lt.s32.totalorder %v19, 8
    %vm166 = vcmp.lt.s32.totalorder %v20, 8
    %vm167 = vcmp.lt.s32.totalorder %v21, 8
    %vm168 = vcmp.lt.s32.totalorder %v22, 8
    %vm169 = vmand %vm161, %vm165
    %vm170 = vmand %vm162, %vm166
    %vm171 = vmand %vm163, %vm167
    %vm172 = vmand %vm164, %vm168
    %173 = vset.pattern.permute.xlu0 0
    %174 = vperm.xlu0 %173, %v19
    %v175 = vpop.permute.xlu0 %174
    %176 = vset.pattern.permute.xlu0 0
    %177 = vperm.xlu0 %176, %v20
    %v178 = vpop.permute.xlu0 %177
    %179 = vset.pattern.permute.xlu0 0
    %180 = vperm.xlu0 %179, %v21
    %v181 = vpop.permute.xlu0 %180
    %182 = vset.pattern.permute.xlu0 0
    %183 = vperm.xlu0 %182, %v22
    %v184 = vpop.permute.xlu0 %183
    %vm185 = vcmp.eq.s32.totalorder %v160, %v175
    %vm186 = vcmp.eq.s32.totalorder %v160, %v178
    %vm187 = vcmp.eq.s32.totalorder %v160, %v181
    %vm188 = vcmp.eq.s32.totalorder %v160, %v184
    %v189 = vsel %vm169, 1, 0
    %v190 = vsel %vm170, 1, 0
    %v191 = vsel %vm171, 1, 0
    %v192 = vsel %vm172, 1, 0
    %193 = vset.pattern.permute.xlu0 0
    %194 = vperm.xlu0 %193, %v189
    %v195 = vpop.permute.xlu0 %194
    %196 = vset.pattern.permute.xlu0 0
    %197 = vperm.xlu0 %196, %v190
    %v198 = vpop.permute.xlu0 %197
    %199 = vset.pattern.permute.xlu0 0
    %200 = vperm.xlu0 %199, %v191
    %v201 = vpop.permute.xlu0 %200
    %202 = vset.pattern.permute.xlu0 0
    %203 = vperm.xlu0 %202, %v192
    %v204 = vpop.permute.xlu0 %203
    %vm205 = vcmp.eq.s32.totalorder %v195, 1
    %vm206 = vcmp.eq.s32.totalorder %v198, 1
    %vm207 = vcmp.eq.s32.totalorder %v201, 1
    %vm208 = vcmp.eq.s32.totalorder %v204, 1
    %vm209 = vmand %vm205, %vm185
    %vm210 = vmand %vm206, %vm186
    %vm211 = vmand %vm207, %vm187
    %vm212 = vmand %vm208, %vm188
    %v213 = vsel %vm209, %v155, %v111
    %v214 = vsel %vm210, %v156, %v112
    %v215 = vsel %vm211, %v157, %v113
    %v216 = vsel %vm212, %v158, %v114
    %vm217 = vcmask 64512
    %v218 = vsel %vm217, %v213, 0.0
    %219 = vadd.xlane.f32.xlu0 %v218
    %v220 = vpop.xlane.xlu0 %219
    %v221 = vsel %vm217, %v214, 0.0
    %222 = vadd.xlane.f32.xlu0 %v221
    %v223 = vpop.xlane.xlu0 %222
    %v224 = vsel %vm217, %v215, 0.0
    %225 = vadd.xlane.f32.xlu0 %v224
    %v226 = vpop.xlane.xlu0 %225
    %v227 = vsel %vm217, %v216, 0.0
    %228 = vadd.xlane.f32.xlu0 %v227
    %v229 = vpop.xlane.xlu0 %228
    %v234 = vlaneseq
    %v235 = vshrl.u32 %v234, 7
    %v236 = vsub.s32 %v160, %v235
    %v237 = vrot.slane %v220, %v236
    %v238 = vadd.s32 %v160, 4294967288
    %v239 = vlaneseq
    %v240 = vshrl.u32 %v239, 7
    %v241 = vsub.s32 %v238, %v240
    %v242 = vrot.slane %v223, %v241
    %vm243 = vcmask 130112
    %v244 = vsel %vm243, %v242, %v237
    %v245 = vadd.s32 %v160, 4294967280
    %v246 = vlaneseq
    %v247 = vshrl.u32 %v246, 7
    %v248 = vsub.s32 %v245, %v247
    %v249 = vrot.slane %v226, %v248
    %vm250 = vcmask 195712
    %v251 = vsel %vm250, %v249, %v244
    %v252 = vadd.s32 %v160, 4294967272
    %v253 = vlaneseq
    %v254 = vshrl.u32 %v253, 7
    %v255 = vsub.s32 %v252, %v254
    %v256 = vrot.slane %v229, %v255
    %vm257 = vcmask 261312
    %v258 = vsel %vm257, %v256, %v251
    %vm260 = vcmask 253952
    %261 = vst.msk [vmem:[#allocation2] sm:$0x1] %vm260, %v258
    // Predicated region
    $region14: #{tpu_custom_call.1} parent=1 // pred_check
      _
    $region15: #{tpu_custom_call.1} parent=1 // pred_check_branch
      %263 = sbr.rel (0) target = $region17
    $region16: #{tpu_custom_call.1} parent=1 // pred_region
      %s265 = ssub.s32 16, 16
      %266 = vsyncadd [#allocation3], %s265
      %s268 = sshll.u32 [#allocation2], 4
      %s269 = int_to_ptr.vmem [resolvable:$true] %s268
      %271 = dma.vmem_to_hbm [thread:$0]  %s269, 16, %s3, [#allocation3]
    $region17: #{tpu_custom_call.1} parent=1 // pred_fallthru
      _
    // Predicated region
    $region18: #{tpu_custom_call.1} parent=1 // pred_check
      _
    $region19: #{tpu_custom_call.1} parent=1 // pred_check_branch
      %273 = sbr.rel (0) target = $region21
    $region20: #{tpu_custom_call.1} parent=1 // pred_region
      %274 = dma.done [#allocation3], 16
    $region21: #{tpu_custom_call.1} parent=1 // pred_fallthru
      _
    %275 = vsyncpa [#allocation3], 1

</llo_original>
